<compile_context>
chip_gen: v7x
topology: tpu7x:2x2x1
jax: 0.10.0
libtpu: 0.0.40
codegen_flags: <defaults>
</compile_context>

<pallas_src>
import functools

import jax
import jax.numpy as jnp
from jax.experimental import pallas as pl
from jax.experimental.pallas import tpu as pltpu

MOMENTUM = 0.9
EPSILON = 1e-05

_VMEM_LIMIT = 48 * 1024 * 1024  # leaves headroom on v7x's 64 MiB VMEM


def _pick_hw_tile(hw, c, bytes_per_elem=4, target_tile_bytes=2 << 20):
    """Largest multiple-of-128 divisor of `hw` with a (C, tile) slab roughly
    <= target_tile_bytes.  Falls back to the full hw extent when hw is not a
    multiple of 128 (a block dim equal to the full array dim is allowed)."""
    if hw % 128 != 0:
        return hw
    max_lanes = max(128, target_tile_bytes // max(1, c * bytes_per_elem))
    best = 128
    t = 128
    while t <= min(hw, max_lanes):
        if hw % t == 0:
            best = t
        t += 128
    return best


def _stats_kernel(x_ref, g_ref, b_ref, mm_ref, mv_ref,
                  scale_ref, shift_ref, nmm_ref, nmv_ref,
                  sum_acc, sq_acc, *, m_total):
    n = pl.program_id(0)
    t = pl.program_id(1)
    is_first = jnp.logical_and(n == 0, t == 0)
    is_last = jnp.logical_and(n == pl.num_programs(0) - 1,
                              t == pl.num_programs(1) - 1)

    @pl.when(is_first)
    def _():
        sum_acc[...] = jnp.zeros_like(sum_acc)
        sq_acc[...] = jnp.zeros_like(sq_acc)

    x = x_ref[0]                      # (C, T) tile
    sum_acc[...] += x                 # lane-wise partial sums: pure VPU adds
    sq_acc[...] += x * x              # single pass: var = E[x^2] - mean^2

    @pl.when(is_last)
    def _():
        inv_m = 1.0 / m_total
        mean = jnp.sum(sum_acc[...], axis=1, keepdims=True) * inv_m   # (C, 1)
        ex2 = jnp.sum(sq_acc[...], axis=1, keepdims=True) * inv_m
        var = ex2 - mean * mean
        # Reference semantics: divide by (eps + var), NOT sqrt(var + eps).
        # Exact reciprocal: runs once on a (C, 1) vector, so its cost is nil.
        inv = pl.reciprocal(EPSILON + var, approx=False)
        scale = g_ref[...] * inv
        scale_ref[...] = scale
        shift_ref[...] = b_ref[...] - mean * scale
        nmm_ref[...] = MOMENTUM * mm_ref[...] + (1.0 - MOMENTUM) * mean
        nmv_ref[...] = MOMENTUM * mv_ref[...] + (1.0 - MOMENTUM) * var


def _apply_kernel(x_ref, scale_ref, shift_ref, y_ref):
    # (C, T) tile: one multiply + one add per element; (C, 1) scale/shift
    # broadcast along the lane axis.
    y_ref[0] = x_ref[0] * scale_ref[...] + shift_ref[...]


def batch_norm_pallas(x_nchw, gamma, beta, moving_mean, moving_var):
    """Training-mode BatchNorm matching the reference `batch_norm` (4-D path).

    x_nchw: (N, C, H, W) float32.  gamma/beta/moving_*: (1, C, 1, 1) float32.
    Returns (Y (N,C,H,W), new_moving_mean (1,C,1,1), new_moving_var (1,C,1,1)).
    """
    N, C, H, W = x_nchw.shape
    HW = H * W
    M = N * HW

    x = x_nchw.reshape(N, C, HW).astype(jnp.float32)   # free reshape, no transpose
    g = gamma.reshape(C, 1).astype(jnp.float32)
    b = beta.reshape(C, 1).astype(jnp.float32)
    mm = moving_mean.reshape(C, 1).astype(jnp.float32)
    mv = moving_var.reshape(C, 1).astype(jnp.float32)

    T = _pick_hw_tile(HW, C)
    nt = HW // T

    x_spec = pl.BlockSpec((1, C, T), lambda n, t: (n, 0, t))
    cvec = lambda: pl.BlockSpec((C, 1), lambda n, t: (0, 0))

    # Phase 1: per-channel statistics -> scale/shift + new moving stats.
    scale, shift, nmm, nmv = pl.pallas_call(
        functools.partial(_stats_kernel, m_total=float(M)),
        out_shape=(jax.ShapeDtypeStruct((C, 1), jnp.float32),) * 4,
        grid=(N, nt),
        in_specs=[x_spec, cvec(), cvec(), cvec(), cvec()],
        out_specs=(cvec(), cvec(), cvec(), cvec()),
        scratch_shapes=[pltpu.VMEM((C, T), jnp.float32),
                        pltpu.VMEM((C, T), jnp.float32)],
        compiler_params=pltpu.CompilerParams(
            dimension_semantics=("arbitrary", "arbitrary"),
            vmem_limit_bytes=_VMEM_LIMIT),
    )(x, g, b, mm, mv)

    # Phase 2: normalize with per-channel scale/shift (lane-dense y tiles).
    y = pl.pallas_call(
        _apply_kernel,
        out_shape=jax.ShapeDtypeStruct((N, C, HW), jnp.float32),
        grid=(N, nt),
        in_specs=[x_spec, cvec(), cvec()],
        out_specs=pl.BlockSpec((1, C, T), lambda n, t: (n, 0, t)),
        compiler_params=pltpu.CompilerParams(
            dimension_semantics=("parallel", "parallel"),
            vmem_limit_bytes=_VMEM_LIMIT),
    )(x, scale, shift)

    # TODO(synk): eval-mode branch ((X - moving_mean) / (moving_var + eps)) is
    # not implemented; this mirrors the grad-enabled (training) path only.
    return (y.reshape(N, C, H, W),
            nmm.reshape(1, C, 1, 1),
            nmv.reshape(1, C, 1, 1))


def _reference(x, gamma, beta, moving_mean, moving_var):
    mean = jnp.mean(x, axis=(0, 2, 3), keepdims=True)
    var = jnp.mean((x - mean) ** 2, axis=(0, 2, 3), keepdims=True)
    x_hat = (x - mean) / (EPSILON + var)
    y = gamma * x_hat + beta
    new_mm = MOMENTUM * moving_mean + (1.0 - MOMENTUM) * mean
    new_mv = MOMENTUM * moving_var + (1.0 - MOMENTUM) * var
    return y, new_mm, new_mv


if __name__ == "__main__":
    key = jax.random.PRNGKey(0)
    N, C, H, W = 2, 4, 16, 16

    x = jax.random.normal(key, (N, C, H, W), dtype=jnp.float32)

    # Deterministic parameter init matching BatchNorm.__init__ (num_dims=4):
    # gamma = ones, beta = zeros, moving_mean = zeros, moving_var = zeros.
    gamma = jnp.ones((1, C, 1, 1), dtype=jnp.float32)
    beta = jnp.zeros((1, C, 1, 1), dtype=jnp.float32)
    moving_mean = jnp.zeros((1, C, 1, 1), dtype=jnp.float32)
    moving_var = jnp.zeros((1, C, 1, 1), dtype=jnp.float32)

    y, new_mm, new_mv = batch_norm_pallas(x, gamma, beta, moving_mean, moving_var)
    jax.block_until_ready((y, new_mm, new_mv))

    y_ref, mm_ref, mv_ref = _reference(x, gamma, beta, moving_mean, moving_var)
    assert jnp.allclose(y, y_ref, atol=1e-5, rtol=1e-5)
    assert jnp.allclose(new_mm, mm_ref, atol=1e-5, rtol=1e-5)
    assert jnp.allclose(new_mv, mv_ref, atol=1e-5, rtol=1e-5)

    print("KERNEL_OK")
</pallas_src>

<mosaic_0001>
module attributes {stable_mosaic.version = 11 : i64} {
  func.func @_stats_kernel(%arg0: i32, %arg1: i32, %arg2: memref<1x4x256xf32, #tpu.memory_space<vmem>>, %arg3: memref<4x1xf32, #tpu.memory_space<vmem>>, %arg4: memref<4x1xf32, #tpu.memory_space<vmem>>, %arg5: memref<4x1xf32, #tpu.memory_space<vmem>>, %arg6: memref<4x1xf32, #tpu.memory_space<vmem>>, %arg7: memref<4x1xf32, #tpu.memory_space<vmem>>, %arg8: memref<4x1xf32, #tpu.memory_space<vmem>>, %arg9: memref<4x1xf32, #tpu.memory_space<vmem>>, %arg10: memref<4x1xf32, #tpu.memory_space<vmem>>, %arg11: memref<4x256xf32, #tpu.memory_space<vmem>>, %arg12: memref<4x256xf32, #tpu.memory_space<vmem>>) attributes {dimension_semantics = [#tpu.dimension_semantics<arbitrary>, #tpu.dimension_semantics<arbitrary>], iteration_bounds = array<i64: 2, 1>, scalar_prefetch = 0 : i64, scratch_operands = 2 : i64, tpu.core_type = #tpu.core_type<tc>, window_params = [{transform_indices = @transform_0, window_bounds = array<i64: 1, 4, 256>}, {pipeline_mode = #tpu.pipeline_mode<synchronous>, transform_indices = @transform_1, window_bounds = array<i64: 4, 1>}, {pipeline_mode = #tpu.pipeline_mode<synchronous>, transform_indices = @transform_2, window_bounds = array<i64: 4, 1>}, {pipeline_mode = #tpu.pipeline_mode<synchronous>, transform_indices = @transform_3, window_bounds = array<i64: 4, 1>}, {pipeline_mode = #tpu.pipeline_mode<synchronous>, transform_indices = @transform_4, window_bounds = array<i64: 4, 1>}, {pipeline_mode = #tpu.pipeline_mode<synchronous>, transform_indices = @transform_5, window_bounds = array<i64: 4, 1>}, {pipeline_mode = #tpu.pipeline_mode<synchronous>, transform_indices = @transform_6, window_bounds = array<i64: 4, 1>}, {pipeline_mode = #tpu.pipeline_mode<synchronous>, transform_indices = @transform_7, window_bounds = array<i64: 4, 1>}, {pipeline_mode = #tpu.pipeline_mode<synchronous>, transform_indices = @transform_8, window_bounds = array<i64: 4, 1>}]} {
    %c0_i32 = arith.constant 0 : i32
    %0 = arith.cmpi eq, %arg0, %c0_i32 : i32
    %c0_i32_0 = arith.constant 0 : i32
    %1 = arith.cmpi eq, %arg1, %c0_i32_0 : i32
    %2 = arith.andi %0, %1 : i1
    %c1_i32 = arith.constant 1 : i32
    %3 = arith.cmpi eq, %arg0, %c1_i32 : i32
    %c0_i32_1 = arith.constant 0 : i32
    %4 = arith.cmpi eq, %arg1, %c0_i32_1 : i32
    %5 = arith.andi %3, %4 : i1
    %6 = arith.extui %2 : i1 to i32
    %c0_i32_2 = arith.constant 0 : i32
    %7 = arith.cmpi ne, %6, %c0_i32_2 : i32
    scf.if %7 {
      %cst = arith.constant 0.000000e+00 : f32
      %19 = vector.broadcast %cst : f32 to vector<4x256xf32>
      %c0_14 = arith.constant 0 : index
      %c0_15 = arith.constant 0 : index
      %20 = vector.load %arg11[%c0_14, %c0_15] : memref<4x256xf32, #tpu.memory_space<vmem>>, vector<4x256xf32>
      tpu.vector_store %arg11[%c0_14, %c0_15], %19 {strides = array<i32>} : memref<4x256xf32, #tpu.memory_space<vmem>>, vector<4x256xf32>,
      %cst_16 = arith.constant 0.000000e+00 : f32
      %21 = vector.broadcast %cst_16 : f32 to vector<4x256xf32>
      %c0_17 = arith.constant 0 : index
      %c0_18 = arith.constant 0 : index
      %22 = vector.load %arg12[%c0_17, %c0_18] : memref<4x256xf32, #tpu.memory_space<vmem>>, vector<4x256xf32>
      tpu.vector_store %arg12[%c0_17, %c0_18], %21 {strides = array<i32>} : memref<4x256xf32, #tpu.memory_space<vmem>>, vector<4x256xf32>,
    } else {
    }
    %c0 = arith.constant 0 : index
    %c0_3 = arith.constant 0 : index
    %c0_4 = arith.constant 0 : index
    %8 = vector.load %arg2[%c0, %c0_3, %c0_4] : memref<1x4x256xf32, #tpu.memory_space<vmem>>, vector<1x4x256xf32>
    %9 = vector.shape_cast %8 : vector<1x4x256xf32> to vector<4x256xf32>
    %c0_5 = arith.constant 0 : index
    %c0_6 = arith.constant 0 : index
    %10 = vector.load %arg11[%c0_5, %c0_6] : memref<4x256xf32, #tpu.memory_space<vmem>>, vector<4x256xf32>
    %11 = arith.addf %10, %9 : vector<4x256xf32>
    %c0_7 = arith.constant 0 : index
    %c0_8 = arith.constant 0 : index
    %12 = vector.load %arg11[%c0_7, %c0_8] : memref<4x256xf32, #tpu.memory_space<vmem>>, vector<4x256xf32>
    tpu.vector_store %arg11[%c0_7, %c0_8], %11 {strides = array<i32>} : memref<4x256xf32, #tpu.memory_space<vmem>>, vector<4x256xf32>,
    %c0_9 = arith.constant 0 : index
    %c0_10 = arith.constant 0 : index
    %13 = vector.load %arg12[%c0_9, %c0_10] : memref<4x256xf32, #tpu.memory_space<vmem>>, vector<4x256xf32>
    %14 = arith.mulf %9, %9 : vector<4x256xf32>
    %15 = arith.addf %13, %14 : vector<4x256xf32>
    %c0_11 = arith.constant 0 : index
    %c0_12 = arith.constant 0 : index
    %16 = vector.load %arg12[%c0_11, %c0_12] : memref<4x256xf32, #tpu.memory_space<vmem>>, vector<4x256xf32>
    tpu.vector_store %arg12[%c0_11, %c0_12], %15 {strides = array<i32>} : memref<4x256xf32, #tpu.memory_space<vmem>>, vector<4x256xf32>,
    %17 = arith.extui %5 : i1 to i32
    %c0_i32_13 = arith.constant 0 : i32
    %18 = arith.cmpi ne, %17, %c0_i32_13 : i32
    scf.if %18 {
      %c0_14 = arith.constant 0 : index
      %c0_15 = arith.constant 0 : index
      %19 = vector.load %arg11[%c0_14, %c0_15] : memref<4x256xf32, #tpu.memory_space<vmem>>, vector<4x256xf32>
      %cst = arith.constant dense<0.000000e+00> : vector<4xf32>
      %20 = vector.multi_reduction <add>, %19, %cst [1] : vector<4x256xf32> to vector<4xf32>
      %21 = vector.shape_cast %20 : vector<4xf32> to vector<4x1xf32>
      %cst_16 = arith.constant 0.001953125 : f32
      %22 = vector.broadcast %cst_16 : f32 to vector<4x1xf32>
      %23 = arith.mulf %21, %22 : vector<4x1xf32>
      %c0_17 = arith.constant 0 : index
      %c0_18 = arith.constant 0 : index
      %24 = vector.load %arg12[%c0_17, %c0_18] : memref<4x256xf32, #tpu.memory_space<vmem>>, vector<4x256xf32>
      %cst_19 = arith.constant dense<0.000000e+00> : vector<4xf32>
      %25 = vector.multi_reduction <add>, %24, %cst_19 [1] : vector<4x256xf32> to vector<4xf32>
      %26 = vector.shape_cast %25 : vector<4xf32> to vector<4x1xf32>
      %cst_20 = arith.constant 0.001953125 : f32
      %27 = vector.broadcast %cst_20 : f32 to vector<4x1xf32>
      %28 = arith.mulf %26, %27 : vector<4x1xf32>
      %29 = arith.mulf %23, %23 : vector<4x1xf32>
      %30 = arith.subf %28, %29 : vector<4x1xf32>
      %cst_21 = arith.constant 9.99999974E-6 : f32
      %31 = vector.broadcast %cst_21 : f32 to vector<4x1xf32>
      %32 = arith.addf %31, %30 : vector<4x1xf32>
      %33 = tpu.reciprocal %32 : vector<4x1xf32> -> vector<4x1xf32>
      %c0_22 = arith.constant 0 : index
      %c0_23 = arith.constant 0 : index
      %34 = vector.load %arg3[%c0_22, %c0_23] : memref<4x1xf32, #tpu.memory_space<vmem>>, vector<4x1xf32>
      %35 = arith.mulf %34, %33 : vector<4x1xf32>
      %c0_24 = arith.constant 0 : index
      %c0_25 = arith.constant 0 : index
      %36 = vector.load %arg7[%c0_24, %c0_25] : memref<4x1xf32, #tpu.memory_space<vmem>>, vector<4x1xf32>
      tpu.vector_store %arg7[%c0_24, %c0_25], %35 {strides = array<i32>} : memref<4x1xf32, #tpu.memory_space<vmem>>, vector<4x1xf32>,
      %c0_26 = arith.constant 0 : index
      %c0_27 = arith.constant 0 : index
      %37 = vector.load %arg4[%c0_26, %c0_27] : memref<4x1xf32, #tpu.memory_space<vmem>>, vector<4x1xf32>
      %38 = arith.mulf %23, %35 : vector<4x1xf32>
      %39 = arith.subf %37, %38 : vector<4x1xf32>
      %c0_28 = arith.constant 0 : index
      %c0_29 = arith.constant 0 : index
      %40 = vector.load %arg8[%c0_28, %c0_29] : memref<4x1xf32, #tpu.memory_space<vmem>>, vector<4x1xf32>
      tpu.vector_store %arg8[%c0_28, %c0_29], %39 {strides = array<i32>} : memref<4x1xf32, #tpu.memory_space<vmem>>, vector<4x1xf32>,
      %c0_30 = arith.constant 0 : index
      %c0_31 = arith.constant 0 : index
      %41 = vector.load %arg5[%c0_30, %c0_31] : memref<4x1xf32, #tpu.memory_space<vmem>>, vector<4x1xf32>
      %cst_32 = arith.constant 0.899999976 : f32
      %42 = vector.broadcast %cst_32 : f32 to vector<4x1xf32>
      %43 = arith.mulf %42, %41 : vector<4x1xf32>
      %cst_33 = arith.constant 1.000000e-01 : f32
      %44 = vector.broadcast %cst_33 : f32 to vector<4x1xf32>
      %45 = arith.mulf %44, %23 : vector<4x1xf32>
      %46 = arith.addf %43, %45 : vector<4x1xf32>
      %c0_34 = arith.constant 0 : index
      %c0_35 = arith.constant 0 : index
      %47 = vector.load %arg9[%c0_34, %c0_35] : memref<4x1xf32, #tpu.memory_space<vmem>>, vector<4x1xf32>
      tpu.vector_store %arg9[%c0_34, %c0_35], %46 {strides = array<i32>} : memref<4x1xf32, #tpu.memory_space<vmem>>, vector<4x1xf32>,
      %c0_36 = arith.constant 0 : index
      %c0_37 = arith.constant 0 : index
      %48 = vector.load %arg6[%c0_36, %c0_37] : memref<4x1xf32, #tpu.memory_space<vmem>>, vector<4x1xf32>
      %cst_38 = arith.constant 0.899999976 : f32
      %49 = vector.broadcast %cst_38 : f32 to vector<4x1xf32>
      %50 = arith.mulf %49, %48 : vector<4x1xf32>
      %cst_39 = arith.constant 1.000000e-01 : f32
      %51 = vector.broadcast %cst_39 : f32 to vector<4x1xf32>
      %52 = arith.mulf %51, %30 : vector<4x1xf32>
      %53 = arith.addf %50, %52 : vector<4x1xf32>
      %c0_40 = arith.constant 0 : index
      %c0_41 = arith.constant 0 : index
      %54 = vector.load %arg10[%c0_40, %c0_41] : memref<4x1xf32, #tpu.memory_space<vmem>>, vector<4x1xf32>
      tpu.vector_store %arg10[%c0_40, %c0_41], %53 {strides = array<i32>} : memref<4x1xf32, #tpu.memory_space<vmem>>, vector<4x1xf32>,
    } else {
    }
    return
  }
  func.func @transform_0(%arg0: i32, %arg1: i32) -> (i32, i32, i32) {
    %c0_i32 = arith.constant 0 : i32
    %c0_i32_0 = arith.constant 0 : i32
    return %arg0, %c0_i32, %arg1 : i32, i32, i32
  }
  func.func @transform_1(%arg0: i32, %arg1: i32) -> (i32, i32) {
    %c0_i32 = arith.constant 0 : i32
    %c0_i32_0 = arith.constant 0 : i32
    %c0_i32_1 = arith.constant 0 : i32
    return %c0_i32, %c0_i32_0 : i32, i32
  }
  func.func @transform_2(%arg0: i32, %arg1: i32) -> (i32, i32) {
    %c0_i32 = arith.constant 0 : i32
    %c0_i32_0 = arith.constant 0 : i32
    %c0_i32_1 = arith.constant 0 : i32
    return %c0_i32, %c0_i32_0 : i32, i32
  }
  func.func @transform_3(%arg0: i32, %arg1: i32) -> (i32, i32) {
    %c0_i32 = arith.constant 0 : i32
    %c0_i32_0 = arith.constant 0 : i32
    %c0_i32_1 = arith.constant 0 : i32
    return %c0_i32, %c0_i32_0 : i32, i32
  }
  func.func @transform_4(%arg0: i32, %arg1: i32) -> (i32, i32) {
    %c0_i32 = arith.constant 0 : i32
    %c0_i32_0 = arith.constant 0 : i32
    %c0_i32_1 = arith.constant 0 : i32
    return %c0_i32, %c0_i32_0 : i32, i32
  }
  func.func @transform_5(%arg0: i32, %arg1: i32) -> (i32, i32) {
    %c0_i32 = arith.constant 0 : i32
    %c0_i32_0 = arith.constant 0 : i32
    %c0_i32_1 = arith.constant 0 : i32
    return %c0_i32, %c0_i32_0 : i32, i32
  }
  func.func @transform_6(%arg0: i32, %arg1: i32) -> (i32, i32) {
    %c0_i32 = arith.constant 0 : i32
    %c0_i32_0 = arith.constant 0 : i32
    %c0_i32_1 = arith.constant 0 : i32
    return %c0_i32, %c0_i32_0 : i32, i32
  }
  func.func @transform_7(%arg0: i32, %arg1: i32) -> (i32, i32) {
    %c0_i32 = arith.constant 0 : i32
    %c0_i32_0 = arith.constant 0 : i32
    %c0_i32_1 = arith.constant 0 : i32
    return %c0_i32, %c0_i32_0 : i32, i32
  }
  func.func @transform_8(%arg0: i32, %arg1: i32) -> (i32, i32) {
    %c0_i32 = arith.constant 0 : i32
    %c0_i32_0 = arith.constant 0 : i32
    %c0_i32_1 = arith.constant 0 : i32
    return %c0_i32, %c0_i32_0 : i32, i32
  }
}

</mosaic_0001>

<llo_original>
// kernel: tpu_custom_call.1
$region0: #{tpu_custom_call.1}
  #allocation0 [shape = 'u32[]', space=smem, size = 0x4, offset = 0x4, fixed_abs, tag = 'smem constant byte address 0x4 - core index']
  #allocation1 [shape = 'u32[144,128]{1,0:T(1,128)}', space=vmem, size = 0x12000, scoped, tag = 'internal scratch']
  #allocation2 [shape = 'f32[4,256]{1,0:T(4,128)}', space=vmem, size = 0x1000, scoped, tag = 'scratch operand']
  #allocation3 [shape = 'f32[4,256]{1,0:T(4,128)}', space=vmem, size = 0x1000, scoped, tag = 'scratch operand']
  %s0 = inlined_call_operand.vmem [shape: f32[2,4,256], index: 0, kind: input, shape index: {}]
  %s1 = inlined_call_operand.vmem [shape: f32[4,1], index: 1, kind: input, shape index: {}]
  %s2 = inlined_call_operand.vmem [shape: f32[4,1], index: 2, kind: input, shape index: {}]
  %s3 = inlined_call_operand.vmem [shape: f32[4,1], index: 3, kind: input, shape index: {}]
  %s4 = inlined_call_operand.vmem [shape: f32[4,1], index: 4, kind: input, shape index: {}]
  %s5 = inlined_call_operand.vmem [shape: f32[4,1], index: 5, kind: output, shape index: {0}]
  %s6 = inlined_call_operand.vmem [shape: f32[4,1], index: 6, kind: output, shape index: {1}]
  %s7 = inlined_call_operand.vmem [shape: f32[4,1], index: 7, kind: output, shape index: {2}]
  %s8 = inlined_call_operand.vmem [shape: f32[4,1], index: 8, kind: output, shape index: {3}]
  %9 = xla_tuple %s5, %s6, %s7, %s8
  %s10 = sld [smem:[#allocation0]]
  $region85: #{tpu_custom_call.1} parent=0
    _
  %s12 = ssub.s32 1, %s10
  %s13 = scalar_select 0, %s12, %s10
  loop: start=0, step=1, limit=4
  $region2: #{tpu_custom_call.1} parent=0 // loop_pre_header
    _
  $region3: #{tpu_custom_call.1} parent=0 // loop_header
    %s15 = sphi 0, %s19
    %p16 = scmp.ge.s32.totalorder %s15, 4
    %s22 = sphi 0, %s34
    %s23 = sphi 0, %s30
    %s24 = sphi 0, %s22
    %s25 = sphi 0, %s23
    %s26 = sphi 0, %s24
    %s27 = sphi 0, %s25
    %s39 = sphi 0, %s41
    %s42 = sphi 0, %s39
    %s43 = sphi 0, %s42
    %s59 = sphi 0, %s43
    %s63 = sphi 0, %s63
    %s65 = sphi 0, %s63
    %s66 = sphi 0, %s65
    %s80 = sphi 0, %s66
    %s84 = sphi 0, %s84
    %s86 = sphi 0, %s84
    %s87 = sphi 0, %s86
    %s101 = sphi 0, %s87
    %s105 = sphi 0, %s105
    %s107 = sphi 0, %s105
    %s108 = sphi 0, %s107
    %s122 = sphi 0, %s108
    %s126 = sphi 0, %s126
    %s128 = sphi 0, %s126
    %s129 = sphi 0, %s128
    %s143 = sphi 0, %s129
    %s147 = sphi 0, %s147
    %s149 = sphi 0, %s147
    %s150 = sphi 0, %s149
    %s164 = sphi 0, %s150
    %s168 = sphi 0, %s168
    %s170 = sphi 0, %s168
    %s171 = sphi 0, %s170
    %s185 = sphi 0, %s171
    %s189 = sphi 0, %s189
    %s191 = sphi 0, %s189
    %s192 = sphi 0, %s191
    %s206 = sphi 0, %s192
    %s210 = sphi 0, %s210
    %s212 = sphi 0, %s210
    %s213 = sphi 0, %s212
    %s227 = sphi 0, %s213
  $region4: #{tpu_custom_call.1} parent=0 // loop_header_branch
    %18 = sbr.rel (%p16) target = $region8
  $region5: #{tpu_custom_call.1} parent=0 // loop_body
    %s20 = ssub.s32 %s15, 1
    %s21 = ssub.s32 %s15, 2
    %s28 = sadd.s32 1, %s23
    %p29 = scmp.ge.s32.totalorder %s28, 1
    %s30 = scalar_select %p29, 0, %s28
    %s31 = sadd.s32 1, %s22
    %s32 = scalar_select %p29, %s31, %s22
    %p33 = scmp.ge.s32.totalorder %s32, 2
    %s34 = scalar_select %p33, 0, %s32
    %s35 = ssub.s32 %s22, %s34
    %s36 = ssub.s32 %s23, %s30
    %s37 = sor.u32 %s35, %s36
    %p38 = scmp.eq.s32.totalorder %s37, 0
    %s40 = sadd.s32 %s39, 1
    %s41 = scalar_select %p38, %s39, %s40
    %p44 = pneg %p38
    %p45 = scmp.eq.s32.totalorder %s15, 1
    %p46 = por %p44, %p45
    %p47 = scmp.ne.s32.totalorder %s39, %s42
    %p48 = scmp.eq.s32.totalorder %s15, 0
    %p49 = por %p47, %p48
    %p50 = scmp.ne.s32.totalorder %s39, %s42
    %p51 = scmp.eq.s32.totalorder %s20, 1
    %p52 = por %p50, %p51
    %p53 = scmp.ne.s32.totalorder %s42, %s43
    %p54 = scmp.eq.s32.totalorder %s20, 0
    %p55 = por %p53, %p54
    %p56 = scmp.ne.s32.totalorder %s42, %s43
    %p57 = scmp.eq.s32.totalorder %s21, 1
    %p58 = por %p56, %p57
    %p60 = scmp.ne.s32.totalorder %s43, %s59
    %p61 = scmp.eq.s32.totalorder %s21, 0
    %p62 = por %p60, %p61
    %s64 = sadd.s32 %s63, 1
    %p67 = scmp.eq.s32.totalorder %s15, 1
    %p68 = scmp.ne.s32.totalorder %s63, %s65
    %p69 = scmp.eq.s32.totalorder %s15, 0
    %p70 = por %p68, %p69
    %p71 = scmp.ne.s32.totalorder %s63, %s65
    %p72 = scmp.eq.s32.totalorder %s20, 1
    %p73 = por %p71, %p72
    %p74 = scmp.ne.s32.totalorder %s65, %s66
    %p75 = scmp.eq.s32.totalorder %s20, 0
    %p76 = por %p74, %p75
    %p77 = scmp.ne.s32.totalorder %s65, %s66
    %p78 = scmp.eq.s32.totalorder %s21, 1
    %p79 = por %p77, %p78
    %p81 = scmp.ne.s32.totalorder %s66, %s80
    %p82 = scmp.eq.s32.totalorder %s21, 0
    %p83 = por %p81, %p82
    %s85 = sadd.s32 %s84, 1
    %p88 = scmp.eq.s32.totalorder %s15, 1
    %p89 = scmp.ne.s32.totalorder %s84, %s86
    %p90 = scmp.eq.s32.totalorder %s15, 0
    %p91 = por %p89, %p90
    %p92 = scmp.ne.s32.totalorder %s84, %s86
    %p93 = scmp.eq.s32.totalorder %s20, 1
    %p94 = por %p92, %p93
    %p95 = scmp.ne.s32.totalorder %s86, %s87
    %p96 = scmp.eq.s32.totalorder %s20, 0
    %p97 = por %p95, %p96
    %p98 = scmp.ne.s32.totalorder %s86, %s87
    %p99 = scmp.eq.s32.totalorder %s21, 1
    %p100 = por %p98, %p99
    %p102 = scmp.ne.s32.totalorder %s87, %s101
    %p103 = scmp.eq.s32.totalorder %s21, 0
    %p104 = por %p102, %p103
    %s106 = sadd.s32 %s105, 1
    %p109 = scmp.eq.s32.totalorder %s15, 1
    %p110 = scmp.ne.s32.totalorder %s105, %s107
    %p111 = scmp.eq.s32.totalorder %s15, 0
    %p112 = por %p110, %p111
    %p113 = scmp.ne.s32.totalorder %s105, %s107
    %p114 = scmp.eq.s32.totalorder %s20, 1
    %p115 = por %p113, %p114
    %p116 = scmp.ne.s32.totalorder %s107, %s108
    %p117 = scmp.eq.s32.totalorder %s20, 0
    %p118 = por %p116, %p117
    %p119 = scmp.ne.s32.totalorder %s107, %s108
    %p120 = scmp.eq.s32.totalorder %s21, 1
    %p121 = por %p119, %p120
    %p123 = scmp.ne.s32.totalorder %s108, %s122
    %p124 = scmp.eq.s32.totalorder %s21, 0
    %p125 = por %p123, %p124
    %s127 = sadd.s32 %s126, 1
    %p130 = scmp.eq.s32.totalorder %s15, 1
    %p131 = scmp.ne.s32.totalorder %s126, %s128
    %p132 = scmp.eq.s32.totalorder %s15, 0
    %p133 = por %p131, %p132
    %p134 = scmp.ne.s32.totalorder %s126, %s128
    %p135 = scmp.eq.s32.totalorder %s20, 1
    %p136 = por %p134, %p135
    %p137 = scmp.ne.s32.totalorder %s128, %s129
    %p138 = scmp.eq.s32.totalorder %s20, 0
    %p139 = por %p137, %p138
    %p140 = scmp.ne.s32.totalorder %s128, %s129
    %p141 = scmp.eq.s32.totalorder %s21, 1
    %p142 = por %p140, %p141
    %p144 = scmp.ne.s32.totalorder %s129, %s143
    %p145 = scmp.eq.s32.totalorder %s21, 0
    %p146 = por %p144, %p145
    %s148 = sadd.s32 %s147, 1
    %p151 = scmp.eq.s32.totalorder %s15, 1
    %p152 = scmp.ne.s32.totalorder %s147, %s149
    %p153 = scmp.eq.s32.totalorder %s15, 0
    %p154 = por %p152, %p153
    %p155 = scmp.ne.s32.totalorder %s147, %s149
    %p156 = scmp.eq.s32.totalorder %s20, 1
    %p157 = por %p155, %p156
    %p158 = scmp.ne.s32.totalorder %s149, %s150
    %p159 = scmp.eq.s32.totalorder %s20, 0
    %p160 = por %p158, %p159
    %p161 = scmp.ne.s32.totalorder %s149, %s150
    %p162 = scmp.eq.s32.totalorder %s21, 1
    %p163 = por %p161, %p162
    %p165 = scmp.ne.s32.totalorder %s150, %s164
    %p166 = scmp.eq.s32.totalorder %s21, 0
    %p167 = por %p165, %p166
    %s169 = sadd.s32 %s168, 1
    %p172 = scmp.eq.s32.totalorder %s15, 1
    %p173 = scmp.ne.s32.totalorder %s168, %s170
    %p174 = scmp.eq.s32.totalorder %s15, 0
    %p175 = por %p173, %p174
    %p176 = scmp.ne.s32.totalorder %s168, %s170
    %p177 = scmp.eq.s32.totalorder %s20, 1
    %p178 = por %p176, %p177
    %p179 = scmp.ne.s32.totalorder %s170, %s171
    %p180 = scmp.eq.s32.totalorder %s20, 0
    %p181 = por %p179, %p180
    %p182 = scmp.ne.s32.totalorder %s170, %s171
    %p183 = scmp.eq.s32.totalorder %s21, 1
    %p184 = por %p182, %p183
    %p186 = scmp.ne.s32.totalorder %s171, %s185
    %p187 = scmp.eq.s32.totalorder %s21, 0
    %p188 = por %p186, %p187
    %s190 = sadd.s32 %s189, 1
    %p193 = scmp.eq.s32.totalorder %s15, 1
    %p194 = scmp.ne.s32.totalorder %s189, %s191
    %p195 = scmp.eq.s32.totalorder %s15, 0
    %p196 = por %p194, %p195
    %p197 = scmp.ne.s32.totalorder %s189, %s191
    %p198 = scmp.eq.s32.totalorder %s20, 1
    %p199 = por %p197, %p198
    %p200 = scmp.ne.s32.totalorder %s191, %s192
    %p201 = scmp.eq.s32.totalorder %s20, 0
    %p202 = por %p200, %p201
    %p203 = scmp.ne.s32.totalorder %s191, %s192
    %p204 = scmp.eq.s32.totalorder %s21, 1
    %p205 = por %p203, %p204
    %p207 = scmp.ne.s32.totalorder %s192, %s206
    %p208 = scmp.eq.s32.totalorder %s21, 0
    %p209 = por %p207, %p208
    %s211 = sadd.s32 %s210, 1
    %p214 = scmp.eq.s32.totalorder %s15, 1
    %p215 = scmp.ne.s32.totalorder %s210, %s212
    %p216 = scmp.eq.s32.totalorder %s15, 0
    %p217 = por %p215, %p216
    %p218 = scmp.ne.s32.totalorder %s210, %s212
    %p219 = scmp.eq.s32.totalorder %s20, 1
    %p220 = por %p218, %p219
    %p221 = scmp.ne.s32.totalorder %s212, %s213
    %p222 = scmp.eq.s32.totalorder %s20, 0
    %p223 = por %p221, %p222
    %p224 = scmp.ne.s32.totalorder %s212, %s213
    %p225 = scmp.eq.s32.totalorder %s21, 1
    %p226 = por %p224, %p225
    %p228 = scmp.ne.s32.totalorder %s213, %s227
    %p229 = scmp.eq.s32.totalorder %s21, 0
    %p230 = por %p228, %p229
    %p231 = scmp.le.s32.totalorder 1, %s15
    %p232 = scmp.lt.s32.totalorder %s15, 3
    %p233 = pnand %p231, %p232
    %p234 = pneg %p233
    // Predicated region
    $region9: #{tpu_custom_call.1} parent=5 // pred_check
      _
    $region10: #{tpu_custom_call.1} parent=5 // pred_check_branch
      %236 = sbr.rel (%p233) target = $region12
    $region11: #{tpu_custom_call.1} parent=5 // pred_region
      %s237 = ssub.s32 %s15, 1
      // Predicated region
      $region13: #{tpu_custom_call.1} parent=11 // pred_check
        %p238 = pneg %p76
      $region14: #{tpu_custom_call.1} parent=11 // pred_check_branch
        %240 = sbr.rel (%p238) target = $region16
      $region15: #{tpu_custom_call.1} parent=11 // pred_region
        _
      $region16: #{tpu_custom_call.1} parent=11 // pred_fallthru
        _
      // Predicated region
      $region17: #{tpu_custom_call.1} parent=11 // pred_check
        %p241 = pneg %p97
      $region18: #{tpu_custom_call.1} parent=11 // pred_check_branch
        %243 = sbr.rel (%p241) target = $region20
      $region19: #{tpu_custom_call.1} parent=11 // pred_region
        _
      $region20: #{tpu_custom_call.1} parent=11 // pred_fallthru
        _
      // Predicated region
      $region21: #{tpu_custom_call.1} parent=11 // pred_check
        %p244 = pneg %p118
      $region22: #{tpu_custom_call.1} parent=11 // pred_check_branch
        %246 = sbr.rel (%p244) target = $region24
      $region23: #{tpu_custom_call.1} parent=11 // pred_region
        _
      $region24: #{tpu_custom_call.1} parent=11 // pred_fallthru
        _
      // Predicated region
      $region25: #{tpu_custom_call.1} parent=11 // pred_check
        %p247 = pneg %p139
      $region26: #{tpu_custom_call.1} parent=11 // pred_check_branch
        %249 = sbr.rel (%p247) target = $region28
      $region27: #{tpu_custom_call.1} parent=11 // pred_region
        _
      $region28: #{tpu_custom_call.1} parent=11 // pred_fallthru
        _
    $region12: #{tpu_custom_call.1} parent=5 // pred_fallthru
      _
    %p250 = scmp.lt.s32.totalorder %s15, 2
    // Predicated region
    $region29: #{tpu_custom_call.1} parent=5 // pred_check
      %p251 = pneg %p250
    $region30: #{tpu_custom_call.1} parent=5 // pred_check_branch
      %253 = sbr.rel (%p251) target = $region32
    $region31: #{tpu_custom_call.1} parent=5 // pred_region
      // Predicated region
      $region33: #{tpu_custom_call.1} parent=31 // pred_check
        %p254 = pneg %p49
      $region34: #{tpu_custom_call.1} parent=31 // pred_check_branch
        %256 = sbr.rel (%p254) target = $region36
      $region35: #{tpu_custom_call.1} parent=31 // pred_region
        %s257 = smul.u32 2, %s23
        %p258 = scmp.lt.s32.totalorder %s22, 1
        %s259 = scalar_select %p258, %s22, 1
        %p260 = scmp.lt.s32.totalorder %s257, 1
        %s261 = scalar_select %p260, %s257, 1
        %s262 = smul.addr %s259, 2
        %s263 = sadd.s32 %s261, %s262
        %s264 = smul.addr %s263, 4
        %s265 = scalar_lea.vmem %s0, %s264
        %s266 = smul.u32 2, %s23
      $region36: #{tpu_custom_call.1} parent=31 // pred_fallthru
        _
    $region32: #{tpu_custom_call.1} parent=5 // pred_fallthru
      _
    %p267 = scmp.le.s32.totalorder 1, %s15
    %p268 = scmp.lt.s32.totalorder %s15, 3
    %p269 = pnand %p267, %p268
    %p270 = pneg %p269
    // Predicated region
    $region37: #{tpu_custom_call.1} parent=5 // pred_check
      _
    $region38: #{tpu_custom_call.1} parent=5 // pred_check_branch
      %272 = sbr.rel (%p269) target = $region40
    $region39: #{tpu_custom_call.1} parent=5 // pred_region
      %s273 = ssub.s32 %s15, 1
      %s274 = smul.u32 2, %s25
      %p275 = scmp.lt.s32.totalorder %s24, 1
      %s276 = scalar_select %p275, %s24, 1
      %p277 = scmp.lt.s32.totalorder %s274, 1
      %s278 = scalar_select %p277, %s274, 1
      %s279 = smul.addr %s276, 2
      %s280 = sadd.s32 %s278, %s279
      %s281 = smul.addr %s280, 4
      %s282 = scalar_lea.vmem %s0, %s281
      %p283 = pneg %p55
      %p284 = pneg %p52
      %p285 = pneg %p76
      %p286 = pneg %p73
      %p287 = pneg %p97
      %p288 = pneg %p94
      %p289 = pneg %p118
      %p290 = pneg %p115
      %p291 = pneg %p139
      %p292 = pneg %p136
      %p293 = pneg %p160
      %p294 = pneg %p157
      %p295 = pneg %p181
      %p296 = pneg %p178
      %p297 = pneg %p202
      %p298 = pneg %p199
      %p299 = pneg %p223
      %p300 = pneg %p220
      %s301 = smul.u32 2, %s25
      %p302 = scmp.lt.s32.totalorder %s24, 1
      %s303 = scalar_select %p302, %s24, 1
      %p304 = scmp.lt.s32.totalorder %s301, 1
      %s305 = scalar_select %p304, %s301, 1
      %s306 = smul.addr %s303, 2
      %s307 = sadd.s32 %s305, %s306
      %s308 = smul.addr %s307, 4
      %s309 = scalar_lea.vmem %s0, %s308
      %s310 = smul.u32 2, %s25
      %p311 = scmp.eq.s32.totalorder %s24, 0
      %p312 = scmp.eq.s32.totalorder %s25, 0
      %p313 = pnand %p311, %p312
      %p314 = pneg %p313
      %p315 = scmp.eq.s32.totalorder %s24, 1
      %p316 = pnand %p315, %p312
      %p317 = pneg %p316
      // Predicated region
      $region41: #{tpu_custom_call.1} parent=39 // pred_check
        _
      $region42: #{tpu_custom_call.1} parent=39 // pred_check_branch
        %319 = sbr.rel (%p313) target = $region44
      $region43: #{tpu_custom_call.1} parent=39 // pred_region
        %320 = vst [vmem:[#allocation2] sm:$0xff] 0.0
        %321 = vst [vmem:[#allocation3] sm:$0xff] 0.0
      $region44: #{tpu_custom_call.1} parent=39 // pred_fallthru
        _
      %v322 = vld [vmem:[%s309] sm:$0xff]
      %v323 = vld [vmem:[#allocation2] sm:$0xff]
      %v324 = vadd.f32 %v323, %v322
      %325 = vst [vmem:[#allocation2] sm:$0xff] %v324
      %v326 = vld [vmem:[#allocation3] sm:$0xff]
      %v327 = vmul.f32 %v322, %v322
      %v328 = vadd.f32 %v326, %v327
      %329 = vst [vmem:[#allocation3] sm:$0xff] %v328
      // Predicated region
      $region45: #{tpu_custom_call.1} parent=39 // pred_check
        _
      $region46: #{tpu_custom_call.1} parent=39 // pred_check_branch
        %331 = sbr.rel (%p316) target = $region48
      $region47: #{tpu_custom_call.1} parent=39 // pred_region
        %v332 = vld [vmem:[#allocation2] sm:$0xff]
        %v334 = vcombine.high %v332, %v332
        %vm336 = vcmask 1043456
        %v337 = vsel %vm336, %v332, 0.0
        %v338 = vsel %vm336, %v334, 0.0
        %v339 = vadd.f32 %v337, %v338
        %340 = vadd.xlane.f32.xlu0 %v339
        %v341 = vpop.xlane.xlu0 %340
        %v342 = vmul.f32 %v341, 0.001953125
        %v343 = vld [vmem:[#allocation3] sm:$0xff]
        %v345 = vcombine.high %v343, %v343
        %v347 = vsel %vm336, %v343, 0.0
        %v348 = vsel %vm336, %v345, 0.0
        %v349 = vadd.f32 %v347, %v348
        %350 = vadd.xlane.f32.xlu0 %v349
        %v351 = vpop.xlane.xlu0 %350
        %v352 = vmul.f32 %v351, 0.001953125
        %v353 = vmul.f32 %v342, %v342
        %v354 = vsub.f32 %v352, %v353
        %v355 = vadd.f32 %v354, 1e-05
        %v356 = vrcp.pop %v355
        %v357 = vld [vmem:[%s1] sm:$0xf]
        %v358 = vmul.f32 %v357, %v356
        %vm359 = vcmask 3072
        %360 = vst.msk [vmem:[%s5] sm:$0xf] %vm359, %v358
        %v361 = vld [vmem:[%s2] sm:$0xf]
        %v362 = vmul.f32 %v342, %v358
        %v363 = vsub.f32 %v361, %v362
        %364 = vst.msk [vmem:[%s6] sm:$0xf] %vm359, %v363
        %v365 = vld [vmem:[%s3] sm:$0xf]
        %v366 = vmul.f32 %v365, 0.9
        %v367 = vmul.f32 %v342, 0.1
        %v368 = vadd.f32 %v366, %v367
        %369 = vst.msk [vmem:[%s7] sm:$0xf] %vm359, %v368
        %v370 = vld [vmem:[%s4] sm:$0xf]
        %v371 = vmul.f32 %v370, 0.9
        %v372 = vmul.f32 %v354, 0.1
        %v373 = vadd.f32 %v371, %v372
        %374 = vst.msk [vmem:[%s8] sm:$0xf] %vm359, %v373
      $region48: #{tpu_custom_call.1} parent=39 // pred_fallthru
        _
      // Predicated region
      $region49: #{tpu_custom_call.1} parent=39 // pred_check
        %p375 = pneg %p157
      $region50: #{tpu_custom_call.1} parent=39 // pred_check_branch
        %377 = sbr.rel (%p375) target = $region52
      $region51: #{tpu_custom_call.1} parent=39 // pred_region
        _
      $region52: #{tpu_custom_call.1} parent=39 // pred_fallthru
        _
      // Predicated region
      $region53: #{tpu_custom_call.1} parent=39 // pred_check
        %p378 = pneg %p178
      $region54: #{tpu_custom_call.1} parent=39 // pred_check_branch
        %380 = sbr.rel (%p378) target = $region56
      $region55: #{tpu_custom_call.1} parent=39 // pred_region
        _
      $region56: #{tpu_custom_call.1} parent=39 // pred_fallthru
        _
      // Predicated region
      $region57: #{tpu_custom_call.1} parent=39 // pred_check
        %p381 = pneg %p199
      $region58: #{tpu_custom_call.1} parent=39 // pred_check_branch
        %383 = sbr.rel (%p381) target = $region60
      $region59: #{tpu_custom_call.1} parent=39 // pred_region
        _
      $region60: #{tpu_custom_call.1} parent=39 // pred_fallthru
        _
      // Predicated region
      $region61: #{tpu_custom_call.1} parent=39 // pred_check
        %p384 = pneg %p220
      $region62: #{tpu_custom_call.1} parent=39 // pred_check_branch
        %386 = sbr.rel (%p384) target = $region64
      $region63: #{tpu_custom_call.1} parent=39 // pred_region
        _
      $region64: #{tpu_custom_call.1} parent=39 // pred_fallthru
        _
      // Predicated region
      $region65: #{tpu_custom_call.1} parent=39 // pred_check
        %p387 = pneg %p157
      $region66: #{tpu_custom_call.1} parent=39 // pred_check_branch
        %389 = sbr.rel (%p387) target = $region68
      $region67: #{tpu_custom_call.1} parent=39 // pred_region
        _
      $region68: #{tpu_custom_call.1} parent=39 // pred_fallthru
        _
      // Predicated region
      $region69: #{tpu_custom_call.1} parent=39 // pred_check
        %p390 = pneg %p178
      $region70: #{tpu_custom_call.1} parent=39 // pred_check_branch
        %392 = sbr.rel (%p390) target = $region72
      $region71: #{tpu_custom_call.1} parent=39 // pred_region
        _
      $region72: #{tpu_custom_call.1} parent=39 // pred_fallthru
        _
      // Predicated region
      $region73: #{tpu_custom_call.1} parent=39 // pred_check
        %p393 = pneg %p199
      $region74: #{tpu_custom_call.1} parent=39 // pred_check_branch
        %395 = sbr.rel (%p393) target = $region76
      $region75: #{tpu_custom_call.1} parent=39 // pred_region
        _
      $region76: #{tpu_custom_call.1} parent=39 // pred_fallthru
        _
      // Predicated region
      $region77: #{tpu_custom_call.1} parent=39 // pred_check
        %p396 = pneg %p220
      $region78: #{tpu_custom_call.1} parent=39 // pred_check_branch
        %398 = sbr.rel (%p396) target = $region80
      $region79: #{tpu_custom_call.1} parent=39 // pred_region
        _
      $region80: #{tpu_custom_call.1} parent=39 // pred_fallthru
        _
    $region40: #{tpu_custom_call.1} parent=5 // pred_fallthru
      _
    %p399 = scmp.le.s32.totalorder 2, %s15
    // Predicated region
    $region81: #{tpu_custom_call.1} parent=5 // pred_check
      %p400 = pneg %p399
    $region82: #{tpu_custom_call.1} parent=5 // pred_check_branch
      %402 = sbr.rel (%p400) target = $region84
    $region83: #{tpu_custom_call.1} parent=5 // pred_region
      %s403 = ssub.s32 %s15, 2
    $region84: #{tpu_custom_call.1} parent=5 // pred_fallthru
      _
  $region6: #{tpu_custom_call.1} parent=0 // loop_footer
    %s19 = sadd.s32 1, %s15
  $region7: #{tpu_custom_call.1} parent=0 // loop_footer_branch
    %14 = sbr.rel target = $region3
  $region8: #{tpu_custom_call.1} parent=0 // loop_exit
    _

</llo_original>
